<compile_context>
chip_gen: v7x
topology: tpu7x:2x2x1
jax: 0.10.0
libtpu: 0.0.40
codegen_flags: <defaults>
</compile_context>

<pallas_src>
import functools

import jax
import jax.numpy as jnp
from jax.experimental import pallas as pl
from jax.experimental.pallas import tpu as pltpu

SYSEVR_DIM = 512
IVDETECT_DIM = 128
HIDDEN = 128
NUM_CLASSES = 2
PADDED_OUT = 128  # lane-dense padded fc2 output width


def _round_up(x, m):
    return ((x + m - 1) // m) * m


def _head_kernel(sys_ref, ivd_ref, w1a_ref, w1b_ref, b1_ref, w2_ref, b2_ref,
                 out_ref):
    # fc1 over the concatenated feature vector, expressed as a split matmul:
    #   concat([sys, ivd], -1) @ W1  ==  sys @ W1[:512] + ivd @ W1[512:]
    h = jnp.dot(sys_ref[...], w1a_ref[...], preferred_element_type=jnp.float32)
    h = h + jnp.dot(ivd_ref[...], w1b_ref[...],
                    preferred_element_type=jnp.float32)
    # Epilogue (bias + ReLU) in f32 — avoids bf16 VPU emulation on v5e.
    h = jnp.maximum(h + b1_ref[...], 0.0)
    # fc2 on the lane-dense padded weights; accumulate in f32.
    h = h.astype(w2_ref.dtype)
    out_ref[...] = (jnp.dot(h, w2_ref[...], preferred_element_type=jnp.float32)
                    + b2_ref[...]).astype(out_ref.dtype)


def prepare_head_params(w1, b1, w2, b2, compute_dtype=jnp.float32):
    """One-time (model-load) weight prep: transpose, split at the concat
    boundary, lift biases to 2-D, zero-pad fc2 to a lane-dense [128,128].

    Args (PyTorch nn.Linear layout, weight = [out, in]):
      w1: [128, 640], b1: [128], w2: [2, 128], b2: [2]
    """
    w1_t = jnp.asarray(w1).T                                  # [640, 128]
    w1a = w1_t[:SYSEVR_DIM].astype(compute_dtype)             # [512, 128]
    w1b = w1_t[SYSEVR_DIM:].astype(compute_dtype)             # [128, 128]
    b1_2d = jnp.asarray(b1, jnp.float32).reshape(1, HIDDEN)   # [1, 128] (f32)
    w2_t = jnp.asarray(w2).T.astype(compute_dtype)            # [128, 2]
    w2_pad = jnp.zeros((HIDDEN, PADDED_OUT), compute_dtype)
    w2_pad = w2_pad.at[:, :NUM_CLASSES].set(w2_t)             # [128, 128]
    b2_pad = jnp.zeros((1, PADDED_OUT), jnp.float32)
    b2_pad = b2_pad.at[:, :NUM_CLASSES].set(
        jnp.asarray(b2, jnp.float32).reshape(1, NUM_CLASSES)) # [1, 128] (f32)
    return (w1a, w1b, b1_2d, w2_pad, b2_pad)


@functools.partial(jax.jit, static_argnames=("tile_b",))
def multimodal_head(sysevr_output, ivdetect_output, params, *, tile_b=1024):
    """Fused concat + Linear(640,128) + ReLU + Linear(128,2).

    Args:
      sysevr_output:   [B, 512]
      ivdetect_output: [B, 128]
      params: output of prepare_head_params
      tile_b: max batch tile (multiple of 8). 1024 keeps the working set well
        under the default scoped-VMEM budget on v5e/v6e/v7x while reaching
        ~85% of HBM roofline; do not blow this up for v7x (64 MiB VMEM).
    Returns:
      logits: [B, 2] float32
    """
    w1a, w1b, b1_2d, w2_pad, b2_pad = params
    compute_dtype = w1a.dtype
    B = sysevr_output.shape[0]

    sys_x = sysevr_output.astype(compute_dtype)
    ivd_x = ivdetect_output.astype(compute_dtype)

    # Batch tile: multiple of 8 (sublane), no larger than needed for small B.
    tb = min(_round_up(tile_b, 8), _round_up(max(B, 1), 8))
    b_pad = _round_up(max(B, 1), tb)
    if b_pad != B:
        pad = b_pad - B
        sys_x = jnp.pad(sys_x, ((0, pad), (0, 0)))
        ivd_x = jnp.pad(ivd_x, ((0, pad), (0, 0)))

    grid = (b_pad // tb,)

    out = pl.pallas_call(
        _head_kernel,
        out_shape=jax.ShapeDtypeStruct((b_pad, PADDED_OUT), jnp.float32),
        grid=grid,
        in_specs=[
            # Streamed, batch-tiled activations (double-buffered by Pallas).
            pl.BlockSpec((tb, SYSEVR_DIM), lambda i: (i, 0)),
            pl.BlockSpec((tb, IVDETECT_DIM), lambda i: (i, 0)),
            # Weights / biases: constant index map -> VMEM-resident.
            pl.BlockSpec((SYSEVR_DIM, HIDDEN), lambda i: (0, 0)),
            pl.BlockSpec((IVDETECT_DIM, HIDDEN), lambda i: (0, 0)),
            pl.BlockSpec((1, HIDDEN), lambda i: (0, 0)),
            pl.BlockSpec((HIDDEN, PADDED_OUT), lambda i: (0, 0)),
            pl.BlockSpec((1, PADDED_OUT), lambda i: (0, 0)),
        ],
        out_specs=pl.BlockSpec((tb, PADDED_OUT), lambda i: (i, 0)),
        compiler_params=pltpu.CompilerParams(
            dimension_semantics=("parallel",),
        ),
    )(sys_x, ivd_x, w1a, w1b, b1_2d, w2_pad, b2_pad)

    # Drop batch padding and the lane padding of fc2 (negligible XLA work).
    return out[:B, :NUM_CLASSES]


def reference_head(sysevr_output, ivdetect_output, w1, b1, w2, b2):
    combined = jnp.concatenate([sysevr_output, ivdetect_output], axis=1)
    h = jax.nn.relu(combined @ w1.T + b1)
    return h @ w2.T + b2


if __name__ == "__main__":
    key = jax.random.PRNGKey(0)
    k_sys, k_ivd, k_w1, k_b1, k_w2, k_b2 = jax.random.split(key, 6)

    B = 2
    # Simulated sub-model outputs (deterministic).
    sysevr_output = jax.random.normal(k_sys, (B, SYSEVR_DIM), jnp.float32)
    ivdetect_output = jax.random.normal(k_ivd, (B, IVDETECT_DIM), jnp.float32)

    # Deterministic parameter init for the two Linear layers
    # (nn.Linear weight shape is [out_features, in_features]).
    combined = SYSEVR_DIM + IVDETECT_DIM
    w1 = jax.random.normal(k_w1, (HIDDEN, combined), jnp.float32) * 0.02
    b1 = jax.random.normal(k_b1, (HIDDEN,), jnp.float32) * 0.02
    w2 = jax.random.normal(k_w2, (NUM_CLASSES, HIDDEN), jnp.float32) * 0.02
    b2 = jax.random.normal(k_b2, (NUM_CLASSES,), jnp.float32) * 0.02

    # One-time weight prep (transpose / split / pad), done outside the call.
    params = prepare_head_params(w1, b1, w2, b2, compute_dtype=jnp.float32)

    out = multimodal_head(sysevr_output, ivdetect_output, params)
    out = jax.block_until_ready(out)

    ref = reference_head(sysevr_output, ivdetect_output, w1, b1, w2, b2)
    assert out.shape == (B, NUM_CLASSES), out.shape
    assert jnp.allclose(out, ref, atol=1e-4, rtol=1e-4), (out, ref)

    print("KERNEL_OK")
</pallas_src>

<mosaic_0001>
module attributes {stable_mosaic.version = 11 : i64} {
  func.func @_head_kernel(%arg0: i32, %arg1: memref<8x512xf32, #tpu.memory_space<vmem>>, %arg2: memref<8x128xf32, #tpu.memory_space<vmem>>, %arg3: memref<512x128xf32, #tpu.memory_space<vmem>>, %arg4: memref<128x128xf32, #tpu.memory_space<vmem>>, %arg5: memref<1x128xf32, #tpu.memory_space<vmem>>, %arg6: memref<128x128xf32, #tpu.memory_space<vmem>>, %arg7: memref<1x128xf32, #tpu.memory_space<vmem>>, %arg8: memref<8x128xf32, #tpu.memory_space<vmem>>) attributes {dimension_semantics = [#tpu.dimension_semantics<parallel>], iteration_bounds = array<i64: 1>, scalar_prefetch = 0 : i64, scratch_operands = 0 : i64, tpu.core_type = #tpu.core_type<tc>, window_params = [{transform_indices = @transform_0, window_bounds = array<i64: 8, 512>}, {transform_indices = @transform_1, window_bounds = array<i64: 8, 128>}, {pipeline_mode = #tpu.pipeline_mode<synchronous>, transform_indices = @transform_2, window_bounds = array<i64: 512, 128>}, {pipeline_mode = #tpu.pipeline_mode<synchronous>, transform_indices = @transform_3, window_bounds = array<i64: 128, 128>}, {pipeline_mode = #tpu.pipeline_mode<synchronous>, transform_indices = @transform_4, window_bounds = array<i64: 1, 128>}, {pipeline_mode = #tpu.pipeline_mode<synchronous>, transform_indices = @transform_5, window_bounds = array<i64: 128, 128>}, {pipeline_mode = #tpu.pipeline_mode<synchronous>, transform_indices = @transform_6, window_bounds = array<i64: 1, 128>}, {transform_indices = @transform_7, window_bounds = array<i64: 8, 128>}]} {
    %c0 = arith.constant 0 : index
    %c0_0 = arith.constant 0 : index
    %0 = vector.load %arg1[%c0, %c0_0] : memref<8x512xf32, #tpu.memory_space<vmem>>, vector<8x512xf32>
    %c0_1 = arith.constant 0 : index
    %c0_2 = arith.constant 0 : index
    %1 = vector.load %arg3[%c0_1, %c0_2] : memref<512x128xf32, #tpu.memory_space<vmem>>, vector<512x128xf32>
    %cst = arith.constant dense<0.000000e+00> : vector<8x128xf32>
    %2 = tpu.matmul %0, %1, %cst {dimension_numbers = #tpu.dot_dimension_numbers<[1], [0], [0], [1], [0, 0, 1, 1], [], []>} : vector<8x512xf32>, vector<512x128xf32>, vector<8x128xf32> -> vector<8x128xf32>
    %c0_3 = arith.constant 0 : index
    %c0_4 = arith.constant 0 : index
    %3 = vector.load %arg2[%c0_3, %c0_4] : memref<8x128xf32, #tpu.memory_space<vmem>>, vector<8x128xf32>
    %c0_5 = arith.constant 0 : index
    %c0_6 = arith.constant 0 : index
    %4 = vector.load %arg4[%c0_5, %c0_6] : memref<128x128xf32, #tpu.memory_space<vmem>>, vector<128x128xf32>
    %cst_7 = arith.constant dense<0.000000e+00> : vector<8x128xf32>
    %5 = tpu.matmul %3, %4, %cst_7 {dimension_numbers = #tpu.dot_dimension_numbers<[1], [0], [0], [1], [0, 0, 1, 1], [], []>} : vector<8x128xf32>, vector<128x128xf32>, vector<8x128xf32> -> vector<8x128xf32>
    %6 = arith.addf %2, %5 : vector<8x128xf32>
    %c0_8 = arith.constant 0 : index
    %c0_9 = arith.constant 0 : index
    %7 = vector.load %arg5[%c0_8, %c0_9] : memref<1x128xf32, #tpu.memory_space<vmem>>, vector<1x128xf32>
    %8 = vector.broadcast %7 : vector<1x128xf32> to vector<8x128xf32>
    %9 = arith.addf %6, %8 : vector<8x128xf32>
    %cst_10 = arith.constant 0.000000e+00 : f32
    %10 = vector.broadcast %cst_10 : f32 to vector<8x128xf32>
    %11 = arith.maximumf %9, %10 : vector<8x128xf32>
    %c0_11 = arith.constant 0 : index
    %c0_12 = arith.constant 0 : index
    %12 = vector.load %arg6[%c0_11, %c0_12] : memref<128x128xf32, #tpu.memory_space<vmem>>, vector<128x128xf32>
    %cst_13 = arith.constant dense<0.000000e+00> : vector<8x128xf32>
    %13 = tpu.matmul %11, %12, %cst_13 {dimension_numbers = #tpu.dot_dimension_numbers<[1], [0], [0], [1], [0, 0, 1, 1], [], []>} : vector<8x128xf32>, vector<128x128xf32>, vector<8x128xf32> -> vector<8x128xf32>
    %c0_14 = arith.constant 0 : index
    %c0_15 = arith.constant 0 : index
    %14 = vector.load %arg7[%c0_14, %c0_15] : memref<1x128xf32, #tpu.memory_space<vmem>>, vector<1x128xf32>
    %15 = vector.broadcast %14 : vector<1x128xf32> to vector<8x128xf32>
    %16 = arith.addf %13, %15 : vector<8x128xf32>
    %c0_16 = arith.constant 0 : index
    %c0_17 = arith.constant 0 : index
    %17 = vector.load %arg8[%c0_16, %c0_17] : memref<8x128xf32, #tpu.memory_space<vmem>>, vector<8x128xf32>
    tpu.vector_store %arg8[%c0_16, %c0_17], %16 {strides = array<i32>} : memref<8x128xf32, #tpu.memory_space<vmem>>, vector<8x128xf32>,
    return
  }
  func.func @transform_0(%arg0: i32) -> (i32, i32) {
    %c0_i32 = arith.constant 0 : i32
    %c0_i32_0 = arith.constant 0 : i32
    return %arg0, %c0_i32 : i32, i32
  }
  func.func @transform_1(%arg0: i32) -> (i32, i32) {
    %c0_i32 = arith.constant 0 : i32
    %c0_i32_0 = arith.constant 0 : i32
    return %arg0, %c0_i32 : i32, i32
  }
  func.func @transform_2(%arg0: i32) -> (i32, i32) {
    %c0_i32 = arith.constant 0 : i32
    %c0_i32_0 = arith.constant 0 : i32
    %c0_i32_1 = arith.constant 0 : i32
    return %c0_i32, %c0_i32_0 : i32, i32
  }
  func.func @transform_3(%arg0: i32) -> (i32, i32) {
    %c0_i32 = arith.constant 0 : i32
    %c0_i32_0 = arith.constant 0 : i32
    %c0_i32_1 = arith.constant 0 : i32
    return %c0_i32, %c0_i32_0 : i32, i32
  }
  func.func @transform_4(%arg0: i32) -> (i32, i32) {
    %c0_i32 = arith.constant 0 : i32
    %c0_i32_0 = arith.constant 0 : i32
    %c0_i32_1 = arith.constant 0 : i32
    return %c0_i32, %c0_i32_0 : i32, i32
  }
  func.func @transform_5(%arg0: i32) -> (i32, i32) {
    %c0_i32 = arith.constant 0 : i32
    %c0_i32_0 = arith.constant 0 : i32
    %c0_i32_1 = arith.constant 0 : i32
    return %c0_i32, %c0_i32_0 : i32, i32
  }
  func.func @transform_6(%arg0: i32) -> (i32, i32) {
    %c0_i32 = arith.constant 0 : i32
    %c0_i32_0 = arith.constant 0 : i32
    %c0_i32_1 = arith.constant 0 : i32
    return %c0_i32, %c0_i32_0 : i32, i32
  }
  func.func @transform_7(%arg0: i32) -> (i32, i32) {
    %c0_i32 = arith.constant 0 : i32
    %c0_i32_0 = arith.constant 0 : i32
    return %arg0, %c0_i32 : i32, i32
  }
}

</mosaic_0001>

<llo_original>
// kernel: multimodal_head.1
$region0: #{multimodal_head.1}
  #allocation0 [shape = 'u32[]', space=smem, size = 0x4, offset = 0x4, fixed_abs, tag = 'smem constant byte address 0x4 - core index']
  #allocation1 [shape = 'u32[144,128]{1,0:T(1,128)}', space=vmem, size = 0x12000, scoped, tag = 'internal scratch']
  %s0 = inlined_call_operand.vmem [shape: f32[8,512], index: 0, kind: input, shape index: {}]
  %s1 = inlined_call_operand.vmem [shape: f32[8,128], index: 1, kind: input, shape index: {}]
  %s2 = inlined_call_operand.hbm [shape: f32[512,128], index: 2, kind: input, shape index: {}]
  %s3 = inlined_call_operand.hbm [shape: f32[128,128], index: 3, kind: input, shape index: {}]
  %s4 = inlined_call_operand.vmem [shape: f32[1,128], index: 4, kind: input, shape index: {}]
  %s5 = inlined_call_operand.hbm [shape: f32[128,128], index: 5, kind: input, shape index: {}]
  %s6 = inlined_call_operand.vmem [shape: f32[1,128], index: 6, kind: input, shape index: {}]
  %s7 = inlined_call_operand.vmem [shape: f32[8,128], index: 7, kind: output, shape index: {}]
  %s8 = sld [smem:[#allocation0]]
  $region50: #{multimodal_head.1} parent=0
    _
  %s10 = ssub.s32 1, %s8
  %s11 = scalar_select 0, %s10, %s8
  $region1: #{multimodal_head.1} parent=0
    #allocation2 [shape = 'u8[262144]{0}', space=vmem, size = 0x40000, scoped, tag = 'input window, operand 2, single buffered']
    #allocation3 [shape = 's32[1]{0}', space=sflag, size = 0x4, scoped, tag = 'scoped memory for multimodal_head.1']
    #allocation4 [shape = 'u8[65536]{0}', space=vmem, size = 0x10000, scoped, tag = 'input window, operand 3, single buffered']
    #allocation5 [shape = 's32[1]{0}', space=sflag, size = 0x4, scoped, tag = 'scoped memory for multimodal_head.1']
    #allocation6 [shape = 'u8[65536]{0}', space=vmem, size = 0x10000, scoped, tag = 'input window, operand 5, single buffered']
    %12 = vsyncpa [#allocation3], 0
    %13 = vsyncpa [#allocation5], 0
    // Predicated region
    $region2: #{multimodal_head.1} parent=1 // pred_check
      _
    $region3: #{multimodal_head.1} parent=1 // pred_check_branch
      %15 = sbr.rel (0) target = $region5
    $region4: #{multimodal_head.1} parent=1 // pred_region
      _
    $region5: #{multimodal_head.1} parent=1 // pred_fallthru
      _
    // Predicated region
    $region6: #{multimodal_head.1} parent=1 // pred_check
      _
    $region7: #{multimodal_head.1} parent=1 // pred_check_branch
      %17 = sbr.rel (0) target = $region9
    $region8: #{multimodal_head.1} parent=1 // pred_region
      _
    $region9: #{multimodal_head.1} parent=1 // pred_fallthru
      _
    // Predicated region
    $region10: #{multimodal_head.1} parent=1 // pred_check
      _
    $region11: #{multimodal_head.1} parent=1 // pred_check_branch
      %19 = sbr.rel (0) target = $region13
    $region12: #{multimodal_head.1} parent=1 // pred_region
      %s21 = ssub.s32 8192, 8192
      %22 = vsyncadd [#allocation3], %s21
      %s23 = sshll.u32 [#allocation2], 4
      %s24 = int_to_ptr.vmem [resolvable:$true] %s23
      %29 = dma.hbm_to_vmem [thread:$0]  %s2, 8192, %s24, [#allocation3], 128, 128, 8
    $region13: #{multimodal_head.1} parent=1 // pred_fallthru
      _
    // Predicated region
    $region14: #{multimodal_head.1} parent=1 // pred_check
      _
    $region15: #{multimodal_head.1} parent=1 // pred_check_branch
      %31 = sbr.rel (0) target = $region17
    $region16: #{multimodal_head.1} parent=1 // pred_region
      %s33 = ssub.s32 2048, 2048
      %34 = vsyncadd [#allocation5], %s33
      %s35 = sshll.u32 [#allocation4], 4
      %s36 = int_to_ptr.vmem [resolvable:$true] %s35
      %41 = dma.hbm_to_vmem [thread:$0]  %s3, 2048, %s36, [#allocation5], 128, 128, 8
    $region17: #{multimodal_head.1} parent=1 // pred_fallthru
      _
    // Predicated region
    $region18: #{multimodal_head.1} parent=1 // pred_check
      _
    $region19: #{multimodal_head.1} parent=1 // pred_check_branch
      %43 = sbr.rel (0) target = $region21
    $region20: #{multimodal_head.1} parent=1 // pred_region
      _
    $region21: #{multimodal_head.1} parent=1 // pred_fallthru
      _
    // Predicated region
    $region22: #{multimodal_head.1} parent=1 // pred_check
      _
    $region23: #{multimodal_head.1} parent=1 // pred_check_branch
      %45 = sbr.rel (0) target = $region25
    $region24: #{multimodal_head.1} parent=1 // pred_region
      %s47 = ssub.s32 2048, 2048
      %48 = vsyncadd [#allocation5], %s47
      %s49 = sshll.u32 [#allocation6], 4
      %s50 = int_to_ptr.vmem [resolvable:$true] %s49
      %55 = dma.hbm_to_vmem [thread:$0]  %s5, 2048, %s50, [#allocation5], 128, 128, 8
    $region25: #{multimodal_head.1} parent=1 // pred_fallthru
      _
    // Predicated region
    $region26: #{multimodal_head.1} parent=1 // pred_check
      _
    $region27: #{multimodal_head.1} parent=1 // pred_check_branch
      %57 = sbr.rel (0) target = $region29
    $region28: #{multimodal_head.1} parent=1 // pred_region
      _
    $region29: #{multimodal_head.1} parent=1 // pred_fallthru
      _
    // Predicated region
    $region30: #{multimodal_head.1} parent=1 // pred_check
      _
    $region31: #{multimodal_head.1} parent=1 // pred_check_branch
      %59 = sbr.rel (0) target = $region33
    $region32: #{multimodal_head.1} parent=1 // pred_region
      %60 = dma.done [#allocation3], 8192
    $region33: #{multimodal_head.1} parent=1 // pred_fallthru
      _
    // Predicated region
    $region34: #{multimodal_head.1} parent=1 // pred_check
      _
    $region35: #{multimodal_head.1} parent=1 // pred_check_branch
      %62 = sbr.rel (0) target = $region37
    $region36: #{multimodal_head.1} parent=1 // pred_region
      %63 = dma.done [#allocation5], 2048
    $region37: #{multimodal_head.1} parent=1 // pred_fallthru
      _
    // Predicated region
    $region38: #{multimodal_head.1} parent=1 // pred_check
      _
    $region39: #{multimodal_head.1} parent=1 // pred_check_branch
      %65 = sbr.rel (0) target = $region41
    $region40: #{multimodal_head.1} parent=1 // pred_region
      %66 = dma.done [#allocation5], 2048
    $region41: #{multimodal_head.1} parent=1 // pred_fallthru
      _
    %v67 = vld [vmem:[%s0] sm:$0xff]
    %v68 = vld [vmem:[%s0 + $0x8] sm:$0xff]
    %v69 = vld [vmem:[%s0 + $0x10] sm:$0xff]
    %v70 = vld [vmem:[%s0 + $0x18] sm:$0xff]
    %v71 = vld [vmem:[#allocation2] sm:$0xff]
    %v72 = vld [vmem:[#allocation2 + $0x8] sm:$0xff]
    %v73 = vld [vmem:[#allocation2 + $0x10] sm:$0xff]
    %v74 = vld [vmem:[#allocation2 + $0x18] sm:$0xff]
    %v75 = vld [vmem:[#allocation2 + $0x20] sm:$0xff]
    %v76 = vld [vmem:[#allocation2 + $0x28] sm:$0xff]
    %v77 = vld [vmem:[#allocation2 + $0x30] sm:$0xff]
    %v78 = vld [vmem:[#allocation2 + $0x38] sm:$0xff]
    %v79 = vld [vmem:[#allocation2 + $0x40] sm:$0xff]
    %v80 = vld [vmem:[#allocation2 + $0x48] sm:$0xff]
    %v81 = vld [vmem:[#allocation2 + $0x50] sm:$0xff]
    %v82 = vld [vmem:[#allocation2 + $0x58] sm:$0xff]
    %v83 = vld [vmem:[#allocation2 + $0x60] sm:$0xff]
    %v84 = vld [vmem:[#allocation2 + $0x68] sm:$0xff]
    %v85 = vld [vmem:[#allocation2 + $0x70] sm:$0xff]
    %v86 = vld [vmem:[#allocation2 + $0x78] sm:$0xff]
    %v87 = vld [vmem:[#allocation2 + $0x80] sm:$0xff]
    %v88 = vld [vmem:[#allocation2 + $0x88] sm:$0xff]
    %v89 = vld [vmem:[#allocation2 + $0x90] sm:$0xff]
    %v90 = vld [vmem:[#allocation2 + $0x98] sm:$0xff]
    %v91 = vld [vmem:[#allocation2 + $0xa0] sm:$0xff]
    %v92 = vld [vmem:[#allocation2 + $0xa8] sm:$0xff]
    %v93 = vld [vmem:[#allocation2 + $0xb0] sm:$0xff]
    %v94 = vld [vmem:[#allocation2 + $0xb8] sm:$0xff]
    %v95 = vld [vmem:[#allocation2 + $0xc0] sm:$0xff]
    %v96 = vld [vmem:[#allocation2 + $0xc8] sm:$0xff]
    %v97 = vld [vmem:[#allocation2 + $0xd0] sm:$0xff]
    %v98 = vld [vmem:[#allocation2 + $0xd8] sm:$0xff]
    %v99 = vld [vmem:[#allocation2 + $0xe0] sm:$0xff]
    %v100 = vld [vmem:[#allocation2 + $0xe8] sm:$0xff]
    %v101 = vld [vmem:[#allocation2 + $0xf0] sm:$0xff]
    %v102 = vld [vmem:[#allocation2 + $0xf8] sm:$0xff]
    %v103 = vld [vmem:[#allocation2 + $0x100] sm:$0xff]
    %v104 = vld [vmem:[#allocation2 + $0x108] sm:$0xff]
    %v105 = vld [vmem:[#allocation2 + $0x110] sm:$0xff]
    %v106 = vld [vmem:[#allocation2 + $0x118] sm:$0xff]
    %v107 = vld [vmem:[#allocation2 + $0x120] sm:$0xff]
    %v108 = vld [vmem:[#allocation2 + $0x128] sm:$0xff]
    %v109 = vld [vmem:[#allocation2 + $0x130] sm:$0xff]
    %v110 = vld [vmem:[#allocation2 + $0x138] sm:$0xff]
    %v111 = vld [vmem:[#allocation2 + $0x140] sm:$0xff]
    %v112 = vld [vmem:[#allocation2 + $0x148] sm:$0xff]
    %v113 = vld [vmem:[#allocation2 + $0x150] sm:$0xff]
    %v114 = vld [vmem:[#allocation2 + $0x158] sm:$0xff]
    %v115 = vld [vmem:[#allocation2 + $0x160] sm:$0xff]
    %v116 = vld [vmem:[#allocation2 + $0x168] sm:$0xff]
    %v117 = vld [vmem:[#allocation2 + $0x170] sm:$0xff]
    %v118 = vld [vmem:[#allocation2 + $0x178] sm:$0xff]
    %v119 = vld [vmem:[#allocation2 + $0x180] sm:$0xff]
    %v120 = vld [vmem:[#allocation2 + $0x188] sm:$0xff]
    %v121 = vld [vmem:[#allocation2 + $0x190] sm:$0xff]
    %v122 = vld [vmem:[#allocation2 + $0x198] sm:$0xff]
    %v123 = vld [vmem:[#allocation2 + $0x1a0] sm:$0xff]
    %v124 = vld [vmem:[#allocation2 + $0x1a8] sm:$0xff]
    %v125 = vld [vmem:[#allocation2 + $0x1b0] sm:$0xff]
    %v126 = vld [vmem:[#allocation2 + $0x1b8] sm:$0xff]
    %v127 = vld [vmem:[#allocation2 + $0x1c0] sm:$0xff]
    %v128 = vld [vmem:[#allocation2 + $0x1c8] sm:$0xff]
    %v129 = vld [vmem:[#allocation2 + $0x1d0] sm:$0xff]
    %v130 = vld [vmem:[#allocation2 + $0x1d8] sm:$0xff]
    %v131 = vld [vmem:[#allocation2 + $0x1e0] sm:$0xff]
    %v132 = vld [vmem:[#allocation2 + $0x1e8] sm:$0xff]
    %v133 = vld [vmem:[#allocation2 + $0x1f0] sm:$0xff]
    %v134 = vld [vmem:[#allocation2 + $0x1f8] sm:$0xff]
    %v135 = vld [vmem:[%s1] sm:$0xff]
    %v136 = vld [vmem:[#allocation4] sm:$0xff]
    %v137 = vld [vmem:[#allocation4 + $0x8] sm:$0xff]
    %v138 = vld [vmem:[#allocation4 + $0x10] sm:$0xff]
    %v139 = vld [vmem:[#allocation4 + $0x18] sm:$0xff]
    %v140 = vld [vmem:[#allocation4 + $0x20] sm:$0xff]
    %v141 = vld [vmem:[#allocation4 + $0x28] sm:$0xff]
    %v142 = vld [vmem:[#allocation4 + $0x30] sm:$0xff]
    %v143 = vld [vmem:[#allocation4 + $0x38] sm:$0xff]
    %v144 = vld [vmem:[#allocation4 + $0x40] sm:$0xff]
    %v145 = vld [vmem:[#allocation4 + $0x48] sm:$0xff]
    %v146 = vld [vmem:[#allocation4 + $0x50] sm:$0xff]
    %v147 = vld [vmem:[#allocation4 + $0x58] sm:$0xff]
    %v148 = vld [vmem:[#allocation4 + $0x60] sm:$0xff]
    %v149 = vld [vmem:[#allocation4 + $0x68] sm:$0xff]
    %v150 = vld [vmem:[#allocation4 + $0x70] sm:$0xff]
    %v151 = vld [vmem:[#allocation4 + $0x78] sm:$0xff]
    %152 = vmatprep.subr.mxu0 0.0
    %153 = vmatpush1.msra.mxu0 %v136
    %154 = vmatprep.subr.mxu0 0.0
    %155 = vmatpush1.msra.mxu0 %v137
    %156 = vmatprep.subr.mxu0 0.0
    %157 = vmatpush1.msra.mxu0 %v138
    %158 = vmatprep.subr.mxu0 0.0
    %159 = vmatpush1.msra.mxu0 %v139
    %160 = vmatprep.subr.mxu0 0.0
    %161 = vmatpush1.msra.mxu0 %v140
    %162 = vmatprep.subr.mxu0 0.0
    %163 = vmatpush1.msra.mxu0 %v141
    %164 = vmatprep.subr.mxu0 0.0
    %165 = vmatpush1.msra.mxu0 %v142
    %166 = vmatprep.subr.mxu0 0.0
    %167 = vmatpush1.msra.mxu0 %v143
    %168 = vmatprep.subr.mxu0 0.0
    %169 = vmatpush1.msra.mxu0 %v144
    %170 = vmatprep.subr.mxu0 0.0
    %171 = vmatpush1.msra.mxu0 %v145
    %172 = vmatprep.subr.mxu0 0.0
    %173 = vmatpush1.msra.mxu0 %v146
    %174 = vmatprep.subr.mxu0 0.0
    %175 = vmatpush1.msra.mxu0 %v147
    %176 = vmatprep.subr.mxu0 0.0
    %177 = vmatpush1.msra.mxu0 %v148
    %178 = vmatprep.subr.mxu0 0.0
    %179 = vmatpush1.msra.mxu0 %v149
    %180 = vmatprep.subr.mxu0 0.0
    %181 = vmatpush1.msra.mxu0 %v150
    %182 = vmatprep.subr.mxu0 0.0
    %183 = vmatpush1.msra.mxu0 %v151
    %184 = vmatprep.subr.mxu0 0.0
    %185 = vmatpush1.msra.mxu0 0.0
    %186 = vmatprep.subr.mxu0 0.0
    %187 = vmatpush1.msra.mxu0 0.0
    %188 = vmatprep.subr.mxu0 0.0
    %189 = vmatpush1.msra.mxu0 0.0
    %190 = vmatprep.subr.mxu0 0.0
    %191 = vmatpush1.msra.mxu0 0.0
    %192 = vmatprep.subr.mxu0 0.0
    %193 = vmatpush1.msra.mxu0 0.0
    %194 = vmatprep.subr.mxu0 0.0
    %195 = vmatpush1.msra.mxu0 0.0
    %196 = vmatprep.subr.mxu0 0.0
    %197 = vmatpush1.msra.mxu0 0.0
    %198 = vmatprep.subr.mxu0 0.0
    %199 = vmatpush1.msra.mxu0 0.0
    %200 = vmatprep.subr.mxu0 0.0
    %201 = vmatpush1.msra.mxu0 0.0
    %202 = vmatprep.subr.mxu0 0.0
    %203 = vmatpush1.msra.mxu0 0.0
    %204 = vmatprep.subr.mxu0 0.0
    %205 = vmatpush1.msra.mxu0 0.0
    %206 = vmatprep.subr.mxu0 0.0
    %207 = vmatpush1.msra.mxu0 0.0
    %208 = vmatprep.subr.mxu0 0.0
    %209 = vmatpush1.msra.mxu0 0.0
    %210 = vmatprep.subr.mxu0 0.0
    %211 = vmatpush1.msra.mxu0 0.0
    %212 = vmatprep.subr.mxu0 0.0
    %213 = vmatpush1.msra.mxu0 0.0
    %214 = vmatprep.subr.mxu0 0.0
    %215 = vmatpush1.msra.mxu0 0.0
    %216 = vmatprep.mubr.f32.mxu0 0.0
    %217 = vmatmul.mubr.f32.gmra.mrb[0].mxu0 %v135
    %v218 = vpop.f32.mrb[0].mxu0
    %v219 = vadd.f32 0.0, %v218
    %v220 = vpop.f32.mrb[0].mxu0
    %221 = vdwg.mxu0
    %222 = vmatprep.subr.mxu0 0.0
    %223 = vmatpush1.msra.mxu0 %v71
    %224 = vmatprep.subr.mxu0 0.0
    %225 = vmatpush1.msra.mxu0 %v72
    %226 = vmatprep.subr.mxu0 0.0
    %227 = vmatpush1.msra.mxu0 %v73
    %228 = vmatprep.subr.mxu0 0.0
    %229 = vmatpush1.msra.mxu0 %v74
    %230 = vmatprep.subr.mxu0 0.0
    %231 = vmatpush1.msra.mxu0 %v75
    %232 = vmatprep.subr.mxu0 0.0
    %233 = vmatpush1.msra.mxu0 %v76
    %234 = vmatprep.subr.mxu0 0.0
    %235 = vmatpush1.msra.mxu0 %v77
    %236 = vmatprep.subr.mxu0 0.0
    %237 = vmatpush1.msra.mxu0 %v78
    %238 = vmatprep.subr.mxu0 0.0
    %239 = vmatpush1.msra.mxu0 %v79
    %240 = vmatprep.subr.mxu0 0.0
    %241 = vmatpush1.msra.mxu0 %v80
    %242 = vmatprep.subr.mxu0 0.0
    %243 = vmatpush1.msra.mxu0 %v81
    %244 = vmatprep.subr.mxu0 0.0
    %245 = vmatpush1.msra.mxu0 %v82
    %246 = vmatprep.subr.mxu0 0.0
    %247 = vmatpush1.msra.mxu0 %v83
    %248 = vmatprep.subr.mxu0 0.0
    %249 = vmatpush1.msra.mxu0 %v84
    %250 = vmatprep.subr.mxu0 0.0
    %251 = vmatpush1.msra.mxu0 %v85
    %252 = vmatprep.subr.mxu0 0.0
    %253 = vmatpush1.msra.mxu0 %v86
    %254 = vmatprep.subr.mxu0 0.0
    %255 = vmatpush1.msra.mxu0 %v87
    %256 = vmatprep.subr.mxu0 0.0
    %257 = vmatpush1.msra.mxu0 %v88
    %258 = vmatprep.subr.mxu0 0.0
    %259 = vmatpush1.msra.mxu0 %v89
    %260 = vmatprep.subr.mxu0 0.0
    %261 = vmatpush1.msra.mxu0 %v90
    %262 = vmatprep.subr.mxu0 0.0
    %263 = vmatpush1.msra.mxu0 %v91
    %264 = vmatprep.subr.mxu0 0.0
    %265 = vmatpush1.msra.mxu0 %v92
    %266 = vmatprep.subr.mxu0 0.0
    %267 = vmatpush1.msra.mxu0 %v93
    %268 = vmatprep.subr.mxu0 0.0
    %269 = vmatpush1.msra.mxu0 %v94
    %270 = vmatprep.subr.mxu0 0.0
    %271 = vmatpush1.msra.mxu0 %v95
    %272 = vmatprep.subr.mxu0 0.0
    %273 = vmatpush1.msra.mxu0 %v96
    %274 = vmatprep.subr.mxu0 0.0
    %275 = vmatpush1.msra.mxu0 %v97
    %276 = vmatprep.subr.mxu0 0.0
    %277 = vmatpush1.msra.mxu0 %v98
    %278 = vmatprep.subr.mxu0 0.0
    %279 = vmatpush1.msra.mxu0 %v99
    %280 = vmatprep.subr.mxu0 0.0
    %281 = vmatpush1.msra.mxu0 %v100
    %282 = vmatprep.subr.mxu0 0.0
    %283 = vmatpush1.msra.mxu0 %v101
    %284 = vmatprep.subr.mxu0 0.0
    %285 = vmatpush1.msra.mxu0 %v102
    %286 = vmatprep.mubr.f32.mxu0 %v68
    %287 = vmatmul.mubr.f32.gmra.mrb[0].mxu0 %v67
    %v288 = vpop.f32.mrb[0].mxu0
    %v289 = vadd.f32 %v219, %v288
    %v290 = vpop.f32.mrb[0].mxu0
    %291 = vdwg.mxu0
    %292 = vmatprep.subr.mxu0 0.0
    %293 = vmatpush1.msra.mxu0 %v103
    %294 = vmatprep.subr.mxu0 0.0
    %295 = vmatpush1.msra.mxu0 %v104
    %296 = vmatprep.subr.mxu0 0.0
    %297 = vmatpush1.msra.mxu0 %v105
    %298 = vmatprep.subr.mxu0 0.0
    %299 = vmatpush1.msra.mxu0 %v106
    %300 = vmatprep.subr.mxu0 0.0
    %301 = vmatpush1.msra.mxu0 %v107
    %302 = vmatprep.subr.mxu0 0.0
    %303 = vmatpush1.msra.mxu0 %v108
    %304 = vmatprep.subr.mxu0 0.0
    %305 = vmatpush1.msra.mxu0 %v109
    %306 = vmatprep.subr.mxu0 0.0
    %307 = vmatpush1.msra.mxu0 %v110
    %308 = vmatprep.subr.mxu0 0.0
    %309 = vmatpush1.msra.mxu0 %v111
    %310 = vmatprep.subr.mxu0 0.0
    %311 = vmatpush1.msra.mxu0 %v112
    %312 = vmatprep.subr.mxu0 0.0
    %313 = vmatpush1.msra.mxu0 %v113
    %314 = vmatprep.subr.mxu0 0.0
    %315 = vmatpush1.msra.mxu0 %v114
    %316 = vmatprep.subr.mxu0 0.0
    %317 = vmatpush1.msra.mxu0 %v115
    %318 = vmatprep.subr.mxu0 0.0
    %319 = vmatpush1.msra.mxu0 %v116
    %320 = vmatprep.subr.mxu0 0.0
    %321 = vmatpush1.msra.mxu0 %v117
    %322 = vmatprep.subr.mxu0 0.0
    %323 = vmatpush1.msra.mxu0 %v118
    %324 = vmatprep.subr.mxu0 0.0
    %325 = vmatpush1.msra.mxu0 %v119
    %326 = vmatprep.subr.mxu0 0.0
    %327 = vmatpush1.msra.mxu0 %v120
    %328 = vmatprep.subr.mxu0 0.0
    %329 = vmatpush1.msra.mxu0 %v121
    %330 = vmatprep.subr.mxu0 0.0
    %331 = vmatpush1.msra.mxu0 %v122
    %332 = vmatprep.subr.mxu0 0.0
    %333 = vmatpush1.msra.mxu0 %v123
    %334 = vmatprep.subr.mxu0 0.0
    %335 = vmatpush1.msra.mxu0 %v124
    %336 = vmatprep.subr.mxu0 0.0
    %337 = vmatpush1.msra.mxu0 %v125
    %338 = vmatprep.subr.mxu0 0.0
    %339 = vmatpush1.msra.mxu0 %v126
    %340 = vmatprep.subr.mxu0 0.0
    %341 = vmatpush1.msra.mxu0 %v127
    %342 = vmatprep.subr.mxu0 0.0
    %343 = vmatpush1.msra.mxu0 %v128
    %344 = vmatprep.subr.mxu0 0.0
    %345 = vmatpush1.msra.mxu0 %v129
    %346 = vmatprep.subr.mxu0 0.0
    %347 = vmatpush1.msra.mxu0 %v130
    %348 = vmatprep.subr.mxu0 0.0
    %349 = vmatpush1.msra.mxu0 %v131
    %350 = vmatprep.subr.mxu0 0.0
    %351 = vmatpush1.msra.mxu0 %v132
    %352 = vmatprep.subr.mxu0 0.0
    %353 = vmatpush1.msra.mxu0 %v133
    %354 = vmatprep.subr.mxu0 0.0
    %355 = vmatpush1.msra.mxu0 %v134
    %356 = vmatprep.mubr.f32.mxu0 %v70
    %357 = vmatmul.mubr.f32.gmra.mrb[0].mxu0 %v69
    %v358 = vpop.f32.mrb[0].mxu0
    %v359 = vadd.f32 %v289, %v358
    %v360 = vpop.f32.mrb[0].mxu0
    %361 = vdwg.mxu0
    %v362 = vld [vmem:[%s4] sm:$0x1]
    %v364 = vlaneseq
    %v365 = vshrl.u32 %v364, 7
    %v366 = vsub.s32 0, %v365
    %v367 = vrot.slane %v362, %v366
    %v369 = vadd.f32 %v359, %v367
    %v370 = vmax.f32 %v369, 0.0
    %v371 = vld [vmem:[#allocation6] sm:$0xff]
    %v372 = vld [vmem:[#allocation6 + $0x8] sm:$0xff]
    %v373 = vld [vmem:[#allocation6 + $0x10] sm:$0xff]
    %v374 = vld [vmem:[#allocation6 + $0x18] sm:$0xff]
    %v375 = vld [vmem:[#allocation6 + $0x20] sm:$0xff]
    %v376 = vld [vmem:[#allocation6 + $0x28] sm:$0xff]
    %v377 = vld [vmem:[#allocation6 + $0x30] sm:$0xff]
    %v378 = vld [vmem:[#allocation6 + $0x38] sm:$0xff]
    %v379 = vld [vmem:[#allocation6 + $0x40] sm:$0xff]
    %v380 = vld [vmem:[#allocation6 + $0x48] sm:$0xff]
    %v381 = vld [vmem:[#allocation6 + $0x50] sm:$0xff]
    %v382 = vld [vmem:[#allocation6 + $0x58] sm:$0xff]
    %v383 = vld [vmem:[#allocation6 + $0x60] sm:$0xff]
    %v384 = vld [vmem:[#allocation6 + $0x68] sm:$0xff]
    %v385 = vld [vmem:[#allocation6 + $0x70] sm:$0xff]
    %v386 = vld [vmem:[#allocation6 + $0x78] sm:$0xff]
    %v387 = vld [vmem:[%s6] sm:$0x1]
    %v389 = vlaneseq
    %v390 = vshrl.u32 %v389, 7
    %v391 = vsub.s32 0, %v390
    %v392 = vrot.slane %v387, %v391
    %394 = vmatprep.subr.mxu0 0.0
    %395 = vmatpush1.msra.mxu0 %v371
    %396 = vmatprep.subr.mxu0 0.0
    %397 = vmatpush1.msra.mxu0 %v372
    %398 = vmatprep.subr.mxu0 0.0
    %399 = vmatpush1.msra.mxu0 %v373
    %400 = vmatprep.subr.mxu0 0.0
    %401 = vmatpush1.msra.mxu0 %v374
    %402 = vmatprep.subr.mxu0 0.0
    %403 = vmatpush1.msra.mxu0 %v375
    %404 = vmatprep.subr.mxu0 0.0
    %405 = vmatpush1.msra.mxu0 %v376
    %406 = vmatprep.subr.mxu0 0.0
    %407 = vmatpush1.msra.mxu0 %v377
    %408 = vmatprep.subr.mxu0 0.0
    %409 = vmatpush1.msra.mxu0 %v378
    %410 = vmatprep.subr.mxu0 0.0
    %411 = vmatpush1.msra.mxu0 %v379
    %412 = vmatprep.subr.mxu0 0.0
    %413 = vmatpush1.msra.mxu0 %v380
    %414 = vmatprep.subr.mxu0 0.0
    %415 = vmatpush1.msra.mxu0 %v381
    %416 = vmatprep.subr.mxu0 0.0
    %417 = vmatpush1.msra.mxu0 %v382
    %418 = vmatprep.subr.mxu0 0.0
    %419 = vmatpush1.msra.mxu0 %v383
    %420 = vmatprep.subr.mxu0 0.0
    %421 = vmatpush1.msra.mxu0 %v384
    %422 = vmatprep.subr.mxu0 0.0
    %423 = vmatpush1.msra.mxu0 %v385
    %424 = vmatprep.subr.mxu0 0.0
    %425 = vmatpush1.msra.mxu0 %v386
    %426 = vmatprep.subr.mxu0 0.0
    %427 = vmatpush1.msra.mxu0 0.0
    %428 = vmatprep.subr.mxu0 0.0
    %429 = vmatpush1.msra.mxu0 0.0
    %430 = vmatprep.subr.mxu0 0.0
    %431 = vmatpush1.msra.mxu0 0.0
    %432 = vmatprep.subr.mxu0 0.0
    %433 = vmatpush1.msra.mxu0 0.0
    %434 = vmatprep.subr.mxu0 0.0
    %435 = vmatpush1.msra.mxu0 0.0
    %436 = vmatprep.subr.mxu0 0.0
    %437 = vmatpush1.msra.mxu0 0.0
    %438 = vmatprep.subr.mxu0 0.0
    %439 = vmatpush1.msra.mxu0 0.0
    %440 = vmatprep.subr.mxu0 0.0
    %441 = vmatpush1.msra.mxu0 0.0
    %442 = vmatprep.subr.mxu0 0.0
    %443 = vmatpush1.msra.mxu0 0.0
    %444 = vmatprep.subr.mxu0 0.0
    %445 = vmatpush1.msra.mxu0 0.0
    %446 = vmatprep.subr.mxu0 0.0
    %447 = vmatpush1.msra.mxu0 0.0
    %448 = vmatprep.subr.mxu0 0.0
    %449 = vmatpush1.msra.mxu0 0.0
    %450 = vmatprep.subr.mxu0 0.0
    %451 = vmatpush1.msra.mxu0 0.0
    %452 = vmatprep.subr.mxu0 0.0
    %453 = vmatpush1.msra.mxu0 0.0
    %454 = vmatprep.subr.mxu0 0.0
    %455 = vmatpush1.msra.mxu0 0.0
    %456 = vmatprep.subr.mxu0 0.0
    %457 = vmatpush1.msra.mxu0 0.0
    %458 = vmatprep.mubr.f32.mxu0 0.0
    %459 = vmatmul.mubr.f32.gmra.mrb[0].mxu0 %v370
    %v460 = vpop.f32.mrb[0].mxu0
    %v461 = vadd.f32 %v392, %v460
    %v462 = vpop.f32.mrb[0].mxu0
    %463 = vdwg.mxu0
    %464 = vst [vmem:[%s7] sm:$0xff] %v461
    // Predicated region
    $region42: #{multimodal_head.1} parent=1 // pred_check
      _
    $region43: #{multimodal_head.1} parent=1 // pred_check_branch
      %466 = sbr.rel (0) target = $region45
    $region44: #{multimodal_head.1} parent=1 // pred_region
      _
    $region45: #{multimodal_head.1} parent=1 // pred_fallthru
      _
    // Predicated region
    $region46: #{multimodal_head.1} parent=1 // pred_check
      _
    $region47: #{multimodal_head.1} parent=1 // pred_check_branch
      %468 = sbr.rel (0) target = $region49
    $region48: #{multimodal_head.1} parent=1 // pred_region
      _
    $region49: #{multimodal_head.1} parent=1 // pred_fallthru
      _
    %469 = vsyncpa [#allocation3], 1
    %470 = vsyncpa [#allocation5], 1

</llo_original>
